<compile_context>
chip_gen: v5e
topology: v5e:2x2
jax: 0.10.0
libtpu: 0.0.40
codegen_flags: <defaults>
</compile_context>

<pallas_src>
import math

import jax
import jax.numpy as jnp
from jax.experimental import pallas as pl
from jax.experimental.pallas import tpu as pltpu


def _round_up(x: int, m: int) -> int:
    return ((x + m - 1) // m) * m


def make_lcdsh_loss(lam: float, max_tile: int = 512):
    """Returns loss_fn(u, y) computing the LCDSH loss with a Pallas kernel."""

    def loss_fn(u, y):
        u = u.astype(jnp.float32)
        y = y.astype(jnp.float32)
        n, bit = u.shape
        n_class = y.shape[1]

        # Tile of the N x N similarity map.  grid > 1 only when n > max_tile,
        # in which case tile == max_tile (so dynamic slice starts are always
        # 0 or a multiple of max_tile — aligned for f32 and packed bf16).
        tile = min(max_tile, _round_up(n, 8))
        n_pad = _round_up(n, tile)
        if n_pad != n:
            u = jnp.pad(u, ((0, n_pad - n), (0, 0)))
            y = jnp.pad(y, ((0, n_pad - n), (0, 0)))
        grid = (n_pad // tile, n_pad // tile)

        # sign(u) and one-hot labels are exactly representable in bf16; cast
        # once in the wrapper (O(N*bit), negligible vs the N^2 kernel).
        b_sign = jnp.sign(u).astype(jnp.bfloat16)
        y_bf16 = y.astype(jnp.bfloat16)

        inv_nn = 1.0 / float(n * n)
        # Every cell touching a zero-padded row/col contributes exactly
        # log(2) to the L1 sum and 0 to L2 -> subtract analytically.
        pad_corr = float(n_pad * n_pad - n * n) * math.log(2.0)

        def nt_dot(a, c):
            # (tm, K) x (tn, K) -> (tm, tn); MXU-native NT matmul, no .T.
            return jax.lax.dot_general(
                a, c,
                dimension_numbers=(((1,), (1,)), ((), ())),
                preferred_element_type=jnp.float32)

        def kernel(u_ref, y_ref, b_ref, out_ref):
            i = pl.program_id(0)
            j = pl.program_id(1)

            @pl.when(j == 0)
            def _init():
                out_ref[...] = jnp.zeros_like(out_ref)

            r0 = pl.multiple_of(i * tile, tile)
            c0 = pl.multiple_of(j * tile, tile)

            u_r = u_ref[pl.ds(r0, tile), :]          # (tile, bit)    f32
            u_c = u_ref[pl.ds(c0, tile), :]
            y_r = y_ref[pl.ds(r0, tile), :]          # (tile, n_class) bf16
            y_c = y_ref[pl.ds(c0, tile), :]
            b_r = b_ref[pl.ds(r0, tile), :]          # (tile, bit)    bf16
            b_c = b_ref[pl.ds(c0, tile), :]

            yy = nt_dot(y_r, y_c)                                   # (t, t)
            ip = jnp.clip(nt_dot(u_r, u_c) * 0.5, -50.0, 50.0)      # (t, t)
            ip_b = nt_dot(b_r, b_c) * 0.5                           # (t, t)

            pos = yy > 0.0
            # L1: log(1 + exp(-s*ip)) with s = 2*(yy>0)-1, via the stable
            # softplus form max(x,0) + log(1+exp(-|x|)), x = -s*ip, |x|=|ip|.
            x = jnp.where(pos, -ip, ip)
            l1 = jnp.maximum(x, 0.0) + jnp.log(1.0 + jnp.exp(-jnp.abs(ip)))
            # sigmoid(a) - sigmoid(b) = 0.5 * (tanh(a/2) - tanh(b/2));
            # tanh rides the EUP slot, no f32 divides / reciprocals.
            diff = 0.5 * (jnp.tanh(0.5 * ip) - jnp.tanh(0.5 * ip_b))
            term = l1 + lam * (diff * diff)

            # Per-step tile reduce (XLU, idle slot) into the resident
            # per-row-tile output block.
            out_ref[...] = out_ref[...] + jnp.sum(term)

        cost = pl.CostEstimate(
            flops=2 * n_pad * n_pad * (2 * bit + n_class) + 24 * n_pad * n_pad,
            transcendentals=4 * n_pad * n_pad,
            bytes_accessed=6 * n_pad * bit + 2 * n_pad * n_class + 4 * grid[0],
        )

        # Raise the scoped VMEM limit only when the tile is large enough for
        # it to matter (v5e default is 16 MiB); 48 MiB fits every generation's
        # physical VMEM (v7x has 64 MiB).
        vmem_limit = 48 * 1024 * 1024 if tile >= 256 else None

        partials = pl.pallas_call(
            kernel,
            out_shape=jax.ShapeDtypeStruct((grid[0], 1, 1), jnp.float32),
            grid=grid,
            in_specs=[
                # Resident full-array operands: one prologue DMA each.
                pl.BlockSpec((n_pad, bit), lambda i, j: (0, 0)),      # u  f32
                pl.BlockSpec((n_pad, n_class), lambda i, j: (0, 0)),  # y  bf16
                pl.BlockSpec((n_pad, bit), lambda i, j: (0, 0)),      # sign(u)
            ],
            # One partial sum per row tile; row axis is "parallel" so v7x's
            # two TensorCores split it, column (reduction) axis is sequential.
            out_specs=pl.BlockSpec((1, 1, 1), lambda i, j: (i, 0, 0)),
            compiler_params=pltpu.CompilerParams(
                dimension_semantics=("parallel", "arbitrary"),
                vmem_limit_bytes=vmem_limit),
            cost_estimate=cost,
        )(u, y_bf16, b_sign)

        # Tiny follow-up reduce + analytic padding correction + mean scaling.
        return (jnp.sum(partials) - pad_corr) * inv_nn

    return loss_fn


def lcdsh_loss_ref(u, y, lam):
    """Pure-JAX reference mirroring the PyTorch forward."""
    s = 2.0 * (y @ y.T > 0).astype(jnp.float32) - 1.0
    ip = jnp.clip((u @ u.T) * 0.5, -50.0, 50.0)
    L1 = jnp.mean(jnp.log(1.0 + jnp.exp(-s * ip)))
    b = jnp.sign(u)
    ip_b = (b @ b.T) * 0.5
    L2 = jnp.mean((jax.nn.sigmoid(ip) - jax.nn.sigmoid(ip_b)) ** 2)
    return L1 + lam * L2


if __name__ == "__main__":
    key = jax.random.PRNGKey(0)
    k_u, k_y, k_u2, k_y2 = jax.random.split(key, 4)

    config = {"lambda": 0.1}
    loss_fn = make_lcdsh_loss(config["lambda"])

    # Small shapes consistent with the hashing setup: N=8, bit=32, 16 classes.
    N, BIT, N_CLASS = 8, 32, 16
    u = jax.random.normal(k_u, (N, BIT), dtype=jnp.float32)
    labels = jax.random.randint(k_y, (N,), 0, N_CLASS)
    y = jax.nn.one_hot(labels, N_CLASS, dtype=jnp.float32)

    loss = jax.block_until_ready(loss_fn(u, y))
    ref = lcdsh_loss_ref(u, y, config["lambda"])
    assert jnp.allclose(loss, ref, rtol=1e-4, atol=1e-5), (loss, ref)

    # Second check exercising the padded path (N not a multiple of 8).
    N2 = 12
    u2 = jax.random.normal(k_u2, (N2, BIT), dtype=jnp.float32)
    labels2 = jax.random.randint(k_y2, (N2,), 0, N_CLASS)
    y2 = jax.nn.one_hot(labels2, N_CLASS, dtype=jnp.float32)

    loss2 = jax.block_until_ready(loss_fn(u2, y2))
    ref2 = lcdsh_loss_ref(u2, y2, config["lambda"])
    assert jnp.allclose(loss2, ref2, rtol=1e-4, atol=1e-5), (loss2, ref2)

    print("KERNEL_OK")
</pallas_src>

<mosaic_0001>
module attributes {stable_mosaic.version = 11 : i64} {
  func.func @kernel(%arg0: i32, %arg1: i32, %arg2: memref<8x32xf32, #tpu.memory_space<vmem>>, %arg3: memref<8x16xbf16, #tpu.memory_space<vmem>>, %arg4: memref<8x32xbf16, #tpu.memory_space<vmem>>, %arg5: memref<1x1x1xf32, #tpu.memory_space<vmem>>) attributes {dimension_semantics = [#tpu.dimension_semantics<parallel>, #tpu.dimension_semantics<arbitrary>], iteration_bounds = array<i64: 1, 1>, scalar_prefetch = 0 : i64, scratch_operands = 0 : i64, tpu.core_type = #tpu.core_type<tc>, window_params = [{pipeline_mode = #tpu.pipeline_mode<synchronous>, transform_indices = @transform_0, window_bounds = array<i64: 8, 32>}, {pipeline_mode = #tpu.pipeline_mode<synchronous>, transform_indices = @transform_1, window_bounds = array<i64: 8, 16>}, {pipeline_mode = #tpu.pipeline_mode<synchronous>, transform_indices = @transform_2, window_bounds = array<i64: 8, 32>}, {transform_indices = @transform_3, window_bounds = array<i64: 1, 1, 1>}]} {
    %c0_i32 = arith.constant 0 : i32
    %0 = arith.cmpi eq, %arg1, %c0_i32 : i32
    %1 = arith.extui %0 : i1 to i32
    %c0_i32_0 = arith.constant 0 : i32
    %2 = arith.cmpi ne, %1, %c0_i32_0 : i32
    scf.if %2 {
      %cst_29 = arith.constant 0.000000e+00 : f32
      %66 = vector.broadcast %cst_29 : f32 to vector<1x1x1xf32>
      %c0_30 = arith.constant 0 : index
      %c0_31 = arith.constant 0 : index
      %c0_32 = arith.constant 0 : index
      %67 = vector.load %arg5[%c0_30, %c0_31, %c0_32] : memref<1x1x1xf32, #tpu.memory_space<vmem>>, vector<1x1x1xf32>
      tpu.vector_store %arg5[%c0_30, %c0_31, %c0_32], %66 {strides = array<i32>} : memref<1x1x1xf32, #tpu.memory_space<vmem>>, vector<1x1x1xf32>,
    } else {
    }
    %c8_i32 = arith.constant 8 : i32
    %3 = arith.muli %arg0, %c8_i32 : i32
    %4 = tpu.assume_multiple %3, 8 : i32
    %c8_i32_1 = arith.constant 8 : i32
    %5 = arith.muli %arg1, %c8_i32_1 : i32
    %6 = tpu.assume_multiple %5, 8 : i32
    %7 = arith.index_cast %4 : i32 to index
    %c0 = arith.constant 0 : index
    %8 = vector.load %arg2[%7, %c0] : memref<8x32xf32, #tpu.memory_space<vmem>>, vector<8x32xf32>
    %9 = arith.index_cast %6 : i32 to index
    %c0_2 = arith.constant 0 : index
    %10 = vector.load %arg2[%9, %c0_2] : memref<8x32xf32, #tpu.memory_space<vmem>>, vector<8x32xf32>
    %11 = arith.index_cast %4 : i32 to index
    %c0_3 = arith.constant 0 : index
    %12 = vector.load %arg3[%11, %c0_3] : memref<8x16xbf16, #tpu.memory_space<vmem>>, vector<8x16xbf16>
    %13 = arith.index_cast %6 : i32 to index
    %c0_4 = arith.constant 0 : index
    %14 = vector.load %arg3[%13, %c0_4] : memref<8x16xbf16, #tpu.memory_space<vmem>>, vector<8x16xbf16>
    %15 = arith.index_cast %4 : i32 to index
    %c0_5 = arith.constant 0 : index
    %16 = vector.load %arg4[%15, %c0_5] : memref<8x32xbf16, #tpu.memory_space<vmem>>, vector<8x32xbf16>
    %17 = arith.index_cast %6 : i32 to index
    %c0_6 = arith.constant 0 : index
    %18 = vector.load %arg4[%17, %c0_6] : memref<8x32xbf16, #tpu.memory_space<vmem>>, vector<8x32xbf16>
    %cst = arith.constant dense<0.000000e+00> : vector<8x8xf32>
    %19 = tpu.matmul %12, %14, %cst {dimension_numbers = #tpu.dot_dimension_numbers<[1], [1], [0], [0], [0, 0, 1, 0], [], []>} : vector<8x16xbf16>, vector<8x16xbf16>, vector<8x8xf32> -> vector<8x8xf32>
    %cst_7 = arith.constant dense<0.000000e+00> : vector<8x8xf32>
    %20 = tpu.matmul %8, %10, %cst_7 {dimension_numbers = #tpu.dot_dimension_numbers<[1], [1], [0], [0], [0, 0, 1, 0], [], []>} : vector<8x32xf32>, vector<8x32xf32>, vector<8x8xf32> -> vector<8x8xf32>
    %cst_8 = arith.constant 5.000000e-01 : f32
    %21 = vector.broadcast %cst_8 : f32 to vector<8x8xf32>
    %22 = arith.mulf %20, %21 : vector<8x8xf32>
    %cst_9 = arith.constant -5.000000e+01 : f32
    %cst_10 = arith.constant 5.000000e+01 : f32
    %23 = vector.broadcast %cst_9 : f32 to vector<8x8xf32>
    %24 = arith.maximumf %23, %22 : vector<8x8xf32>
    %25 = vector.broadcast %cst_10 : f32 to vector<8x8xf32>
    %26 = arith.minimumf %25, %24 : vector<8x8xf32>
    %cst_11 = arith.constant dense<0.000000e+00> : vector<8x8xf32>
    %27 = tpu.matmul %16, %18, %cst_11 {dimension_numbers = #tpu.dot_dimension_numbers<[1], [1], [0], [0], [0, 0, 1, 0], [], []>} : vector<8x32xbf16>, vector<8x32xbf16>, vector<8x8xf32> -> vector<8x8xf32>
    %cst_12 = arith.constant 5.000000e-01 : f32
    %28 = vector.broadcast %cst_12 : f32 to vector<8x8xf32>
    %29 = arith.mulf %27, %28 : vector<8x8xf32>
    %cst_13 = arith.constant 0.000000e+00 : f32
    %30 = vector.broadcast %cst_13 : f32 to vector<8x8xf32>
    %31 = arith.cmpf ogt, %19, %30 : vector<8x8xf32>
    %cst_14 = arith.constant 0.000000e+00 : f32
    %32 = vector.broadcast %cst_14 : f32 to vector<8x8xf32>
    %33 = arith.subf %32, %26 : vector<8x8xf32>
    %34 = arith.select %31, %33, %26 : vector<8x8xi1>, vector<8x8xf32>
    %cst_15 = arith.constant 0.000000e+00 : f32
    %35 = vector.broadcast %cst_15 : f32 to vector<8x8xf32>
    %36 = arith.maximumf %34, %35 : vector<8x8xf32>
    %37 = math.absf %26 : vector<8x8xf32>
    %cst_16 = arith.constant 0.000000e+00 : f32
    %38 = vector.broadcast %cst_16 : f32 to vector<8x8xf32>
    %39 = arith.subf %38, %37 : vector<8x8xf32>
    %40 = math.exp %39 : vector<8x8xf32>
    %cst_17 = arith.constant 1.000000e+00 : f32
    %41 = vector.broadcast %cst_17 : f32 to vector<8x8xf32>
    %42 = arith.addf %41, %40 : vector<8x8xf32>
    %43 = math.log %42 : vector<8x8xf32>
    %44 = arith.addf %36, %43 : vector<8x8xf32>
    %cst_18 = arith.constant 5.000000e-01 : f32
    %45 = vector.broadcast %cst_18 : f32 to vector<8x8xf32>
    %46 = arith.mulf %45, %26 : vector<8x8xf32>
    %47 = math.tanh %46 : vector<8x8xf32>
    %cst_19 = arith.constant 5.000000e-01 : f32
    %48 = vector.broadcast %cst_19 : f32 to vector<8x8xf32>
    %49 = arith.mulf %48, %29 : vector<8x8xf32>
    %50 = math.tanh %49 : vector<8x8xf32>
    %51 = arith.subf %47, %50 : vector<8x8xf32>
    %cst_20 = arith.constant 5.000000e-01 : f32
    %52 = vector.broadcast %cst_20 : f32 to vector<8x8xf32>
    %53 = arith.mulf %52, %51 : vector<8x8xf32>
    %54 = arith.mulf %53, %53 : vector<8x8xf32>
    %cst_21 = arith.constant 1.000000e-01 : f32
    %55 = vector.broadcast %cst_21 : f32 to vector<8x8xf32>
    %56 = arith.mulf %55, %54 : vector<8x8xf32>
    %57 = arith.addf %44, %56 : vector<8x8xf32>
    %c0_22 = arith.constant 0 : index
    %c0_23 = arith.constant 0 : index
    %c0_24 = arith.constant 0 : index
    %58 = vector.load %arg5[%c0_22, %c0_23, %c0_24] : memref<1x1x1xf32, #tpu.memory_space<vmem>>, vector<1x1x1xf32>
    %59 = vector.shape_cast %57 : vector<8x8xf32> to vector<1x8x8xf32>
    %cst_25 = arith.constant dense<0.000000e+00> : vector<1xf32>
    %60 = vector.multi_reduction <add>, %59, %cst_25 [1, 2] : vector<1x8x8xf32> to vector<1xf32>
    %61 = vector.shape_cast %60 : vector<1xf32> to vector<1x1x1xf32>
    %62 = vector.extract %61[0, 0, 0] : f32 from vector<1x1x1xf32>
    %63 = vector.broadcast %62 : f32 to vector<1x1x1xf32>
    %64 = arith.addf %58, %63 : vector<1x1x1xf32>
    %c0_26 = arith.constant 0 : index
    %c0_27 = arith.constant 0 : index
    %c0_28 = arith.constant 0 : index
    %65 = vector.load %arg5[%c0_26, %c0_27, %c0_28] : memref<1x1x1xf32, #tpu.memory_space<vmem>>, vector<1x1x1xf32>
    tpu.vector_store %arg5[%c0_26, %c0_27, %c0_28], %64 {strides = array<i32>} : memref<1x1x1xf32, #tpu.memory_space<vmem>>, vector<1x1x1xf32>,
    return
  }
  func.func @transform_0(%arg0: i32, %arg1: i32) -> (i32, i32) {
    %c0_i32 = arith.constant 0 : i32
    %c0_i32_0 = arith.constant 0 : i32
    %c0_i32_1 = arith.constant 0 : i32
    return %c0_i32, %c0_i32_0 : i32, i32
  }
  func.func @transform_1(%arg0: i32, %arg1: i32) -> (i32, i32) {
    %c0_i32 = arith.constant 0 : i32
    %c0_i32_0 = arith.constant 0 : i32
    %c0_i32_1 = arith.constant 0 : i32
    return %c0_i32, %c0_i32_0 : i32, i32
  }
  func.func @transform_2(%arg0: i32, %arg1: i32) -> (i32, i32) {
    %c0_i32 = arith.constant 0 : i32
    %c0_i32_0 = arith.constant 0 : i32
    %c0_i32_1 = arith.constant 0 : i32
    return %c0_i32, %c0_i32_0 : i32, i32
  }
  func.func @transform_3(%arg0: i32, %arg1: i32) -> (i32, i32, i32) {
    %c0_i32 = arith.constant 0 : i32
    %c0_i32_0 = arith.constant 0 : i32
    %c0_i32_1 = arith.constant 0 : i32
    return %arg0, %c0_i32, %c0_i32_0 : i32, i32, i32
  }
}

</mosaic_0001>

<llo_original>
// kernel: tpu_custom_call.1
$region0: #{tpu_custom_call.1}
  #allocation0 [shape = 'u32[]', space=smem, size = 0x4, offset = 0x4, fixed_abs, tag = 'smem constant byte address 0x4 - core index']
  #allocation1 [shape = 'u32[72,128]{1,0:T(1,128)}', space=vmem, size = 0x9000, scoped, tag = 'internal scratch']
  %s0 = inlined_call_operand.hbm [shape: f32[8,32], index: 0, kind: input, shape index: {}]
  %s1 = inlined_call_operand.hbm [shape: bf16[8,16], index: 1, kind: input, shape index: {}]
  %s2 = inlined_call_operand.hbm [shape: bf16[8,32], index: 2, kind: input, shape index: {}]
  %s3 = inlined_call_operand.hbm [shape: f32[1,1,1], index: 3, kind: output, shape index: {}]
  %s4 = sld [smem:[#allocation0]]
  $region38: #{tpu_custom_call.1} parent=0
    _
  %s6 = ssub.s32 1, %s4
  %s7 = scalar_select 0, %s6, %s4
  $region1: #{tpu_custom_call.1} parent=0
    #allocation2 [shape = 'u8[4096]{0}', space=vmem, size = 0x1000, scoped, tag = 'input window, operand 0, single buffered']
    #allocation3 [shape = 's32[1]{0}', space=sflag, size = 0x4, scoped, tag = 'scoped memory for tpu_custom_call.1']
    #allocation4 [shape = 's32[1]{0}', space=sflag, size = 0x4, scoped, tag = 'scoped memory for tpu_custom_call.1']
    #allocation5 [shape = 'u8[2048]{0}', space=vmem, size = 0x800, scoped, tag = 'input window, operand 1, single buffered']
    #allocation6 [shape = 's32[1]{0}', space=sflag, size = 0x4, scoped, tag = 'scoped memory for tpu_custom_call.1']
    #allocation7 [shape = 'u8[2048]{0}', space=vmem, size = 0x800, scoped, tag = 'input window, operand 2, single buffered']
    #allocation8 [shape = 'u8[512]{0}', space=vmem, size = 0x400, scoped, tag = 'output window, operand 0, single buffered']
    %8 = vsyncpa [#allocation3], 0
    %9 = vsyncpa [#allocation6], 0
    %10 = vsyncpa [#allocation4], 0
    // Predicated region
    $region2: #{tpu_custom_call.1} parent=1 // pred_check
      _
    $region3: #{tpu_custom_call.1} parent=1 // pred_check_branch
      %12 = sbr.rel (0) target = $region5
    $region4: #{tpu_custom_call.1} parent=1 // pred_region
      %14 = vsyncadd [#allocation3], 0
      %s16 = sshll.u32 %s0, 4
      %s17 = int_to_ptr.hbm [resolvable:$true] %s16
      %s18 = sshll.u32 [#allocation2], 4
      %s19 = int_to_ptr.vmem [resolvable:$true] %s18
      %21 = dma.hbm_to_vmem [thread:$0]  %s17, 128, %s19, [#allocation3]
    $region5: #{tpu_custom_call.1} parent=1 // pred_fallthru
      _
    // Predicated region
    $region6: #{tpu_custom_call.1} parent=1 // pred_check
      _
    $region7: #{tpu_custom_call.1} parent=1 // pred_check_branch
      %23 = sbr.rel (0) target = $region9
    $region8: #{tpu_custom_call.1} parent=1 // pred_region
      %25 = vsyncadd [#allocation6], 0
      %s27 = sshll.u32 %s1, 4
      %s28 = int_to_ptr.hbm [resolvable:$true] %s27
      %s29 = sshll.u32 [#allocation5], 4
      %s30 = int_to_ptr.vmem [resolvable:$true] %s29
      %32 = dma.hbm_to_vmem [thread:$0]  %s28, 64, %s30, [#allocation6]
    $region9: #{tpu_custom_call.1} parent=1 // pred_fallthru
      _
    // Predicated region
    $region10: #{tpu_custom_call.1} parent=1 // pred_check
      _
    $region11: #{tpu_custom_call.1} parent=1 // pred_check_branch
      %34 = sbr.rel (0) target = $region13
    $region12: #{tpu_custom_call.1} parent=1 // pred_region
      %36 = vsyncadd [#allocation6], 0
      %s38 = sshll.u32 %s2, 4
      %s39 = int_to_ptr.hbm [resolvable:$true] %s38
      %s40 = sshll.u32 [#allocation7], 4
      %s41 = int_to_ptr.vmem [resolvable:$true] %s40
      %43 = dma.hbm_to_vmem [thread:$0]  %s39, 64, %s41, [#allocation6]
    $region13: #{tpu_custom_call.1} parent=1 // pred_fallthru
      _
    // Predicated region
    $region14: #{tpu_custom_call.1} parent=1 // pred_check
      _
    $region15: #{tpu_custom_call.1} parent=1 // pred_check_branch
      %45 = sbr.rel (0) target = $region17
    $region16: #{tpu_custom_call.1} parent=1 // pred_region
      %47 = dma.done [#allocation3], 128
    $region17: #{tpu_custom_call.1} parent=1 // pred_fallthru
      _
    // Predicated region
    $region18: #{tpu_custom_call.1} parent=1 // pred_check
      _
    $region19: #{tpu_custom_call.1} parent=1 // pred_check_branch
      %49 = sbr.rel (0) target = $region21
    $region20: #{tpu_custom_call.1} parent=1 // pred_region
      %51 = dma.done [#allocation6], 64
    $region21: #{tpu_custom_call.1} parent=1 // pred_fallthru
      _
    // Predicated region
    $region22: #{tpu_custom_call.1} parent=1 // pred_check
      _
    $region23: #{tpu_custom_call.1} parent=1 // pred_check_branch
      %53 = sbr.rel (0) target = $region25
    $region24: #{tpu_custom_call.1} parent=1 // pred_region
      %55 = dma.done [#allocation6], 64
    $region25: #{tpu_custom_call.1} parent=1 // pred_fallthru
      _
    %p57 = scmp.eq.s32.totalorder 0, 0
    // Predicated region
    $region26: #{tpu_custom_call.1} parent=1 // pred_check
      %p58 = pneg %p57
    $region27: #{tpu_custom_call.1} parent=1 // pred_check_branch
      %60 = sbr.rel (%p58) target = $region29
    $region28: #{tpu_custom_call.1} parent=1 // pred_region
      %vm61 = vcmask 0
      %62 = vst.msk [vmem:[#allocation8] sm:$0x1] %vm61, 0.0
    $region29: #{tpu_custom_call.1} parent=1 // pred_fallthru
      _
    %s63 = smul.u32 0, 8
    %s64 = smul.u32 0, 8
    %s65 = scalar_lea.vmem [#allocation2], %s63
    %v66 = vld [vmem:[%s65] sm:$0xff]
    %s67 = scalar_lea.vmem [#allocation2], %s64
    %v68 = vld [vmem:[%s67] sm:$0xff]
    %s69 = sshra.s32 %s63, 3
    %s70 = sand.u32 %s63, 7
    %s71 = smul.addr %s69, 4
    %s72 = scalar_lea.vmem [#allocation5], %s71
    %v73 = vld [vmem:[%s72] sm:$0xf]
    %s74 = sshra.s32 %s64, 3
    %s75 = sand.u32 %s64, 7
    %s76 = smul.addr %s74, 4
    %s77 = scalar_lea.vmem [#allocation5], %s76
    %v78 = vld [vmem:[%s77] sm:$0xf]
    %s79 = smul.addr %s69, 4
    %s80 = scalar_lea.vmem [#allocation7], %s79
    %v81 = vld [vmem:[%s80] sm:$0xf]
    %s82 = smul.addr %s74, 4
    %s83 = scalar_lea.vmem [#allocation7], %s82
    %v84 = vld [vmem:[%s83] sm:$0xf]
    %vm85 = vcmask 130048
    %v87 = vsel %vm85, %v73, 0
    %v90 = vsel %vm85, %v78, 0
    %92 = vmatpush.bf16.xpose.msra.mxu0 0
    %93 = vmatpush.bf16.xpose.msra.mxu0 0
    %94 = vmatpush.bf16.xpose.msra.mxu0 0
    %95 = vmatpush.bf16.xpose.msra.mxu0 0
    %96 = vmatpush.bf16.xpose.msra.mxu0 0
    %97 = vmatpush.bf16.xpose.msra.mxu0 0
    %98 = vmatpush.bf16.xpose.msra.mxu0 0
    %99 = vmatpush.bf16.xpose.msra.mxu0 %v90
    %100 = vmatmul.bf16.gmra.mxu0 %v87
    %v101 = vpop.f32.mrf.mxu0
    %v102 = vadd.f32 0.0, %v101
    %v103 = vpop.f32.mrf.mxu0
    %104 = vdwg.mxu0
    %vm105 = vcmask 261120
    %v107 = vsel %vm105, %v66, 0
    %v110 = vsel %vm105, %v68, 0
    %112 = vmatpush.xpose.msra.mxu0 0.0
    %113 = vmatpush.xpose.msra.mxu0 0.0
    %114 = vmatpush.xpose.msra.mxu0 0.0
    %115 = vmatpush.xpose.msra.mxu0 0.0
    %116 = vmatpush.xpose.msra.mxu0 0.0
    %117 = vmatpush.xpose.msra.mxu0 0.0
    %118 = vmatpush.xpose.msra.mxu0 0.0
    %119 = vmatpush.xpose.msra.mxu0 0.0
    %120 = vmatpush.xpose.msra.mxu0 0.0
    %121 = vmatpush.xpose.msra.mxu0 0.0
    %122 = vmatpush.xpose.msra.mxu0 0.0
    %123 = vmatpush.xpose.msra.mxu0 0.0
    %124 = vmatpush.xpose.msra.mxu0 0.0
    %125 = vmatpush.xpose.msra.mxu0 0.0
    %126 = vmatpush.xpose.msra.mxu0 0.0
    %127 = vmatpush.xpose.msra.mxu0 %v110
    %128 = vmatmul.f32.gmra.mxu0 %v107
    %v129 = vpop.f32.mrf.mxu0
    %v130 = vadd.f32 0.0, %v129
    %131 = vdwg.mxu0
    %v132 = vmul.f32 %v130, 0.5
    %v133 = vmax.f32 %v132, -50.0
    %v134 = vmin.f32 %v133, 50.0
    %v136 = vsel %vm105, %v81, 0
    %v139 = vsel %vm105, %v84, 0
    %141 = vmatpush.bf16.xpose.msra.mxu0 0
    %142 = vmatpush.bf16.xpose.msra.mxu0 0
    %143 = vmatpush.bf16.xpose.msra.mxu0 0
    %144 = vmatpush.bf16.xpose.msra.mxu0 0
    %145 = vmatpush.bf16.xpose.msra.mxu0 0
    %146 = vmatpush.bf16.xpose.msra.mxu0 0
    %147 = vmatpush.bf16.xpose.msra.mxu0 0
    %148 = vmatpush.bf16.xpose.msra.mxu0 %v139
    %149 = vmatmul.bf16.gmra.mxu0 %v136
    %v150 = vpop.f32.mrf.mxu0
    %v151 = vadd.f32 0.0, %v150
    %v152 = vpop.f32.mrf.mxu0
    %153 = vdwg.mxu0
    %v154 = vmul.f32 %v151, 0.5
    %vm155 = vcmp.gt.f32.partialorder %v102, 0.0
    %v156 = vsub.f32 0.0, %v134
    %v157 = vsel %vm155, %v156, %v134
    %v158 = vmax.f32 %v157, 0.0
    %v159 = vand.u32 2147483647, %v134
    %v160 = vsub.f32 0.0, %v159
    %v161 = vmul.f32 %v160, 1.442695
    %v162 = vpow.pop %v161
    %v163 = vadd.f32 %v162, 1.0
    %v164 = vlog2.pop %v163
    %v165 = vmul.f32 %v164, 0.6931472
    %v166 = vadd.f32 %v158, %v165
    %v167 = vmul.f32 %v134, 0.5
    %v168 = vtanh.pop %v167
    %v169 = vmul.f32 %v154, 0.5
    %v170 = vtanh.pop %v169
    %v171 = vsub.f32 %v168, %v170
    %v172 = vmul.f32 %v171, 0.5
    %v173 = vmul.f32 %v172, %v172
    %v174 = vmul.f32 %v173, 0.1
    %v175 = vadd.f32 %v166, %v174
    %v176 = vld [vmem:[#allocation8] sm:$0x1]
    %vm177 = vcmask 64512
    %v178 = vsel %vm177, %v175, 0.0
    %179 = vadd.xlane.f32.xlu0 %v178
    %v180 = vpop.xlane.xlu0 %179
    %v181 = vrot.slane %v180, 4
    %v182 = vadd.f32 %v180, %v181
    %v183 = vrot.slane %v182, 2
    %v184 = vadd.f32 %v182, %v183
    %v185 = vrot.slane %v184, 1
    %v186 = vadd.f32 %v184, %v185
    %s187 = vtos %v186
    %v188 = vstv %s187
    %v189 = vadd.f32 %v176, %v188
    %vm190 = vcmask 0
    %191 = vst.msk [vmem:[#allocation8] sm:$0x1] %vm190, %v189
    // Predicated region
    $region30: #{tpu_custom_call.1} parent=1 // pred_check
      _
    $region31: #{tpu_custom_call.1} parent=1 // pred_check_branch
      %193 = sbr.rel (0) target = $region33
    $region32: #{tpu_custom_call.1} parent=1 // pred_region
      %195 = vsyncadd [#allocation4], 0
      %s197 = sshll.u32 [#allocation8], 4
      %s198 = int_to_ptr.vmem [resolvable:$true] %s197
      %s199 = sshll.u32 %s3, 4
      %s200 = int_to_ptr.hbm [resolvable:$true] %s199
      %202 = dma.vmem_to_hbm [thread:$0]  %s198, 16, %s200, [#allocation4]
    $region33: #{tpu_custom_call.1} parent=1 // pred_fallthru
      _
    // Predicated region
    $region34: #{tpu_custom_call.1} parent=1 // pred_check
      _
    $region35: #{tpu_custom_call.1} parent=1 // pred_check_branch
      %204 = sbr.rel (0) target = $region37
    $region36: #{tpu_custom_call.1} parent=1 // pred_region
      %206 = dma.done [#allocation4], 16
    $region37: #{tpu_custom_call.1} parent=1 // pred_fallthru
      _
    %207 = vsyncpa [#allocation3], 1
    %208 = vsyncpa [#allocation6], 1
    %209 = vsyncpa [#allocation4], 1

</llo_original>
